<compile_context>
chip_gen: v7x
topology: tpu7x:2x2x1
jax: 0.10.0
libtpu: 0.0.40
codegen_flags: <defaults>
</compile_context>

<pallas_src>
import functools

import jax
import jax.numpy as jnp
from jax import lax
from jax.experimental import pallas as pl
from jax.experimental.pallas import tpu as pltpu


def _pattern_kernel(m_ref, mu_ref, scal_ref, pat_ref, *, force_symmetric):
    """One-shot producer: solves the batch-invariant Markowitz + softmax head
    and writes the lane-dense weight pattern pat[0, l] = w[l % A].

    m_ref   : (A, A) f32   parameter matrix
    mu_ref  : (1, A) f32   expected returns (row)
    scal_ref: (1, 3) f32   [gamma_sqrt, alpha, temperature]
    pat_ref : (1, out_cols) f32
    """
    A = m_ref.shape[0]
    out_cols = pat_ref.shape[1]

    M = m_ref[...]
    sc = scal_ref[...]                      # (1, 3)
    g = sc[:, 0:1]                          # (1, 1) gamma_sqrt
    al = jnp.abs(sc[:, 1:2])                # (1, 1) |alpha|
    temp = sc[:, 2:3]                       # (1, 1) temperature

    if force_symmetric:
        # S = M @ M^T (contract last dims -> no transpose); S is symmetric.
        S = lax.dot_general(M, M, (((1,), (1,)), ((), ())),
                            preferred_element_type=jnp.float32)
        # R = S^T S == S @ S for symmetric S.
        R = lax.dot_general(S, S, (((1,), (0,)), ((), ())),
                            preferred_element_type=jnp.float32)
    else:
        # R = M^T M, contracted without an explicit transpose.
        R = lax.dot_general(M, M, (((0,), (0,)), ((), ())),
                            preferred_element_type=jnp.float32)

    row_ids = lax.broadcasted_iota(jnp.int32, (A, A), 0)
    col_ids = lax.broadcasted_iota(jnp.int32, (A, A), 1)
    diag = row_ids == col_ids
    eye = diag.astype(jnp.float32)

    # H is SPD whenever alpha != 0 (or R full rank) -> pivot-free elimination ok.
    H = (g * g) * R + al * eye

    mu_row = mu_ref[...]                                        # (1, A)
    # mu as a column without an explicit transpose: mask diagonal, reduce lanes.
    mu_col = jnp.sum(jnp.where(diag, mu_row, 0.0),
                     axis=1, keepdims=True)                     # (A, 1)

    # Gauss-Jordan on the augmented system [H | mu | 1]: we only need the two
    # solves H^{-1}mu and H^{-1}1, not the full inverse.  Static slices only.
    rowc_ids = lax.broadcasted_iota(jnp.int32, (A, 1), 0)
    work = H
    x_mu = mu_col
    x_one = jnp.ones((A, 1), jnp.float32)
    for k in range(A):
        rowW = work[k:k + 1, :]                     # (1, A) pivot row
        rmu = x_mu[k:k + 1, :]                      # (1, 1)
        rone = x_one[k:k + 1, :]                    # (1, 1)
        rcp = pl.reciprocal(rowW[:, k:k + 1], approx=False)   # (1, 1) 1/pivot
        rowW_n = rowW * rcp
        rmu_n = rmu * rcp
        rone_n = rone * rcp
        colk = work[:, k:k + 1]                     # (A, 1) pivot column
        factor = jnp.where(rowc_ids == k, 0.0, colk)
        work = jnp.where(rowc_ids == k, rowW_n, work - factor * rowW_n)
        x_mu = jnp.where(rowc_ids == k, rmu_n, x_mu - factor * rmu_n)
        x_one = jnp.where(rowc_ids == k, rone_n, x_one - factor * rone_n)

    # KKT solve of  max mu^T w - w^T H w  s.t. 1^T w = 1.
    s_mu = jnp.sum(x_mu, axis=0, keepdims=True)                 # (1, 1)
    s_one = jnp.sum(x_one, axis=0, keepdims=True)               # (1, 1) > 0 (SPD)
    lam = (s_mu - 2.0) * pl.reciprocal(s_one, approx=False)
    pre_w = 0.5 * (x_mu - lam * x_one)                          # (A, 1)

    # SoftmaxAllocator (variational, cap inactive) == softmax(pre_w / T).
    z = pre_w * pl.reciprocal(temp, approx=False)
    z = z - jnp.max(z, axis=0, keepdims=True)
    e = jnp.exp(z)
    w_col = e * pl.reciprocal(jnp.sum(e, axis=0, keepdims=True), approx=False)

    # Lane-dense repeating pattern: pattern[0, l] = w[l % A].
    sub_ids = lax.broadcasted_iota(jnp.int32, (A, out_cols), 0)
    lane_ids = lax.broadcasted_iota(jnp.int32, (A, out_cols), 1)
    scatter = ((lane_ids % A) == sub_ids).astype(jnp.float32)   # (A, out_cols)
    pat_ref[...] = jnp.sum(scatter * w_col, axis=0, keepdims=True)


def _fill_kernel(pat_ref, out_ref):
    """Pure HBM-write-bound fill: broadcast the resident (1, out_cols) pattern
    into one large lane-dense output block."""
    out_ref[...] = jnp.broadcast_to(pat_ref[...], out_ref.shape)


def softmax_network_forward(x, matrix, exp_returns, gamma_sqrt, alpha, temperature,
                            *, force_symmetric=True, max_weight=0.2,
                            block_rows=8192):
    """JAX/Pallas equivalent of SoftMaxNetwork.forward(x) -> (n, n_assets)."""
    del max_weight  # TODO(synk): cap handled only when inactive (see header).
    n = int(x.shape[0])
    A = int(matrix.shape[0])

    matrix = matrix.astype(jnp.float32)
    mu_row = exp_returns.reshape(1, A).astype(jnp.float32)
    scalars = jnp.concatenate([
        jnp.ravel(jnp.asarray(gamma_sqrt, jnp.float32)),
        jnp.ravel(jnp.asarray(alpha, jnp.float32)),
        jnp.ravel(jnp.asarray(temperature, jnp.float32)),
    ]).reshape(1, 3)

    # Lane-dense packing: each 128-wide slab row holds `reps` consecutive
    # (identical) output rows of width A.  If A doesn't pack, pad out_cols to a
    # multiple of 128 and slice in the wrapper (stores stay unmasked/dense).
    pack = (A <= 128) and (128 % A == 0)
    if pack:
        reps = 128 // A
        out_cols = 128
        n_rows = pl.cdiv(n, reps)
    else:
        reps = 1
        out_cols = pl.cdiv(A, 128) * 128
        n_rows = n

    # ---- Producer: batch-invariant (1, out_cols) pattern, computed ONCE ----
    pattern = pl.pallas_call(
        functools.partial(_pattern_kernel, force_symmetric=force_symmetric),
        out_shape=jax.ShapeDtypeStruct((1, out_cols), jnp.float32),
        grid_spec=pltpu.PrefetchScalarGridSpec(
            num_scalar_prefetch=0,
            grid=(1,),
            in_specs=[
                pl.BlockSpec((A, A), lambda i: (0, 0)),
                pl.BlockSpec((1, A), lambda i: (0, 0)),
                pl.BlockSpec((1, 3), lambda i: (0, 0)),
            ],
            out_specs=pl.BlockSpec((1, out_cols), lambda i: (0, 0)),
        ),
        compiler_params=pltpu.CompilerParams(
            dimension_semantics=("arbitrary",)),
    )(matrix, mu_row, scalars)

    # ---- Fill: broadcast the pattern into big lane-dense blocks ----
    # Cap block bytes so double-buffered output stays well under the default
    # scoped VMEM on every generation (and far under v7x's 64 MiB physical).
    vmem_budget = 8 * 1024 * 1024
    max_rows = max(8, ((vmem_budget // (2 * 4 * out_cols)) // 8) * 8)
    block_rows = max(8, (min(block_rows, max_rows) // 8) * 8)

    if n_rows <= block_rows:
        tile_rows = n_rows            # block == full array dims
        rows_padded = n_rows
    else:
        tile_rows = block_rows        # multiple of 8
        rows_padded = pl.cdiv(n_rows, block_rows) * block_rows
    num_blocks = rows_padded // tile_rows

    out = pl.pallas_call(
        _fill_kernel,
        out_shape=jax.ShapeDtypeStruct((rows_padded, out_cols), jnp.float32),
        grid_spec=pltpu.PrefetchScalarGridSpec(
            num_scalar_prefetch=0,
            grid=(num_blocks,),
            in_specs=[
                # Same block index every step -> pattern stays VMEM-resident.
                pl.BlockSpec((1, out_cols), lambda b: (0, 0)),
            ],
            out_specs=pl.BlockSpec((tile_rows, out_cols), lambda b: (b, 0)),
        ),
        compiler_params=pltpu.CompilerParams(
            # Independent output blocks: megacore-safe on v7x (no scratch init).
            dimension_semantics=("parallel",)),
    )(pattern)

    if pack:
        out = out.reshape(rows_padded * reps, A)
        return out[:n]
    return out[:n, :A]


if __name__ == "__main__":
    key = jax.random.PRNGKey(0)
    k_m, k_mu, k_x = jax.random.split(key, 3)

    n_assets = 8
    batch = 4
    force_symmetric = True
    max_weight = 0.2

    # Parameters (module init: eye / zeros / ones; perturbed slightly so the
    # numerical check is non-trivial).
    matrix = (jnp.eye(n_assets, dtype=jnp.float32)
              + 0.05 * jax.random.normal(k_m, (n_assets, n_assets), jnp.float32))
    exp_returns = 0.05 * jax.random.normal(k_mu, (n_assets,), jnp.float32)
    gamma_sqrt = jnp.full((1,), 1.1, jnp.float32)
    alpha = jnp.full((1,), 0.9, jnp.float32)
    temperature = jnp.full((1,), 1.25, jnp.float32)

    # x: only len(x) is consumed by the forward pass.
    x = jax.random.normal(k_x, (batch, n_assets), jnp.float32)

    weights = softmax_network_forward(
        x, matrix, exp_returns, gamma_sqrt, alpha, temperature,
        force_symmetric=force_symmetric, max_weight=max_weight)
    weights = jax.block_until_ready(weights)

    # Pure-JAX reference for the implemented math.
    S = matrix @ matrix.T if force_symmetric else matrix
    R = jnp.dot(S.T, S, precision=jax.lax.Precision.HIGHEST)
    H = (gamma_sqrt[0] ** 2) * R + jnp.abs(alpha[0]) * jnp.eye(n_assets, dtype=jnp.float32)
    a = jnp.linalg.solve(H, exp_returns)
    b = jnp.linalg.solve(H, jnp.ones((n_assets,), jnp.float32))
    lam = (jnp.sum(a) - 2.0) / jnp.sum(b)
    pre_w = 0.5 * (a - lam * b)
    w_ref = jax.nn.softmax(pre_w / temperature[0])
    ref = jnp.broadcast_to(w_ref[None, :], (batch, n_assets))

    assert weights.shape == (batch, n_assets), weights.shape
    assert bool(jnp.allclose(weights, ref, rtol=2e-3, atol=1e-4)), (
        "kernel/reference mismatch")
    # Sanity: rows sum to 1 (softmax output).
    assert bool(jnp.allclose(jnp.sum(weights, axis=1), 1.0, atol=1e-4))

    print("KERNEL_OK")
</pallas_src>

<mosaic_0001>
module attributes {stable_mosaic.version = 11 : i64} {
  func.func @_pattern_kernel(%arg0: i32, %arg1: memref<8x8xf32, #tpu.memory_space<vmem>>, %arg2: memref<1x8xf32, #tpu.memory_space<vmem>>, %arg3: memref<1x3xf32, #tpu.memory_space<vmem>>, %arg4: memref<1x128xf32, #tpu.memory_space<vmem>>) attributes {dimension_semantics = [#tpu.dimension_semantics<arbitrary>], iteration_bounds = array<i64: 1>, scalar_prefetch = 0 : i64, scratch_operands = 0 : i64, tpu.core_type = #tpu.core_type<tc>, window_params = [{pipeline_mode = #tpu.pipeline_mode<synchronous>, transform_indices = @transform_0, window_bounds = array<i64: 8, 8>}, {pipeline_mode = #tpu.pipeline_mode<synchronous>, transform_indices = @transform_1, window_bounds = array<i64: 1, 8>}, {pipeline_mode = #tpu.pipeline_mode<synchronous>, transform_indices = @transform_2, window_bounds = array<i64: 1, 3>}, {pipeline_mode = #tpu.pipeline_mode<synchronous>, transform_indices = @transform_3, window_bounds = array<i64: 1, 128>}]} {
    %c0 = arith.constant 0 : index
    %c0_0 = arith.constant 0 : index
    %0 = vector.load %arg1[%c0, %c0_0] : memref<8x8xf32, #tpu.memory_space<vmem>>, vector<8x8xf32>
    %c0_1 = arith.constant 0 : index
    %c0_2 = arith.constant 0 : index
    %1 = vector.load %arg3[%c0_1, %c0_2] : memref<1x3xf32, #tpu.memory_space<vmem>>, vector<1x3xf32>
    %2 = vector.extract_strided_slice %1 {offsets = [0, 0], sizes = [1, 1], strides = [1, 1]} : vector<1x3xf32> to vector<1x1xf32>
    %3 = vector.extract_strided_slice %1 {offsets = [0, 1], sizes = [1, 1], strides = [1, 1]} : vector<1x3xf32> to vector<1x1xf32>
    %4 = math.absf %3 : vector<1x1xf32>
    %5 = vector.extract_strided_slice %1 {offsets = [0, 2], sizes = [1, 1], strides = [1, 1]} : vector<1x3xf32> to vector<1x1xf32>
    %cst = arith.constant dense<0.000000e+00> : vector<8x8xf32>
    %6 = tpu.matmul %0, %0, %cst {dimension_numbers = #tpu.dot_dimension_numbers<[1], [1], [0], [0], [0, 0, 1, 0], [], []>} : vector<8x8xf32>, vector<8x8xf32>, vector<8x8xf32> -> vector<8x8xf32>
    %cst_3 = arith.constant dense<0.000000e+00> : vector<8x8xf32>
    %7 = tpu.matmul %6, %6, %cst_3 {dimension_numbers = #tpu.dot_dimension_numbers<[1], [0], [0], [1], [0, 0, 1, 1], [], []>} : vector<8x8xf32>, vector<8x8xf32>, vector<8x8xf32> -> vector<8x8xf32>
    %8 = tpu.iota {dimensions = array<i32: 0>} : vector<8x8xi32>
    %9 = tpu.iota {dimensions = array<i32: 1>} : vector<8x8xi32>
    %10 = arith.cmpi eq, %8, %9 : vector<8x8xi32>
    %11 = arith.extui %10 : vector<8x8xi1> to vector<8x8xi32>
    %12 = arith.sitofp %11 : vector<8x8xi32> to vector<8x8xf32>
    %13 = arith.mulf %2, %2 : vector<1x1xf32>
    %14 = vector.broadcast %13 : vector<1x1xf32> to vector<8x8xf32>
    %15 = arith.mulf %14, %7 : vector<8x8xf32>
    %16 = vector.broadcast %4 : vector<1x1xf32> to vector<8x8xf32>
    %17 = arith.mulf %16, %12 : vector<8x8xf32>
    %18 = arith.addf %15, %17 : vector<8x8xf32>
    %c0_4 = arith.constant 0 : index
    %c0_5 = arith.constant 0 : index
    %19 = vector.load %arg2[%c0_4, %c0_5] : memref<1x8xf32, #tpu.memory_space<vmem>>, vector<1x8xf32>
    %cst_6 = arith.constant 0.000000e+00 : f32
    %20 = vector.shape_cast %19 : vector<1x8xf32> to vector<1x8xf32>
    %21 = vector.broadcast %20 : vector<1x8xf32> to vector<8x8xf32>
    %22 = vector.broadcast %cst_6 : f32 to vector<8x8xf32>
    %23 = arith.select %10, %21, %22 : vector<8x8xi1>, vector<8x8xf32>
    %cst_7 = arith.constant dense<0.000000e+00> : vector<8xf32>
    %24 = vector.multi_reduction <add>, %23, %cst_7 [1] : vector<8x8xf32> to vector<8xf32>
    %25 = vector.shape_cast %24 : vector<8xf32> to vector<8x1xf32>
    %26 = tpu.iota {dimensions = array<i32: 0>} : vector<8x1xi32>
    %cst_8 = arith.constant 1.000000e+00 : f32
    %27 = vector.broadcast %cst_8 : f32 to vector<8x1xf32>
    %28 = vector.extract_strided_slice %18 {offsets = [0, 0], sizes = [1, 8], strides = [1, 1]} : vector<8x8xf32> to vector<1x8xf32>
    %29 = vector.extract_strided_slice %25 {offsets = [0, 0], sizes = [1, 1], strides = [1, 1]} : vector<8x1xf32> to vector<1x1xf32>
    %30 = vector.extract_strided_slice %27 {offsets = [0, 0], sizes = [1, 1], strides = [1, 1]} : vector<8x1xf32> to vector<1x1xf32>
    %31 = vector.extract_strided_slice %28 {offsets = [0, 0], sizes = [1, 1], strides = [1, 1]} : vector<1x8xf32> to vector<1x1xf32>
    %32 = tpu.reciprocal %31 : vector<1x1xf32> -> vector<1x1xf32>
    %33 = vector.broadcast %32 : vector<1x1xf32> to vector<1x8xf32>
    %34 = arith.mulf %28, %33 : vector<1x8xf32>
    %35 = arith.mulf %29, %32 : vector<1x1xf32>
    %36 = arith.mulf %30, %32 : vector<1x1xf32>
    %37 = vector.extract_strided_slice %18 {offsets = [0, 0], sizes = [8, 1], strides = [1, 1]} : vector<8x8xf32> to vector<8x1xf32>
    %c0_i32 = arith.constant 0 : i32
    %38 = vector.broadcast %c0_i32 : i32 to vector<8x1xi32>
    %39 = arith.cmpi eq, %26, %38 : vector<8x1xi32>
    %cst_9 = arith.constant 0.000000e+00 : f32
    %40 = vector.broadcast %cst_9 : f32 to vector<8x1xf32>
    %41 = arith.select %39, %40, %37 : vector<8x1xi1>, vector<8x1xf32>
    %c0_i32_10 = arith.constant 0 : i32
    %42 = vector.broadcast %c0_i32_10 : i32 to vector<8x1xi32>
    %43 = arith.cmpi eq, %26, %42 : vector<8x1xi32>
    %44 = vector.broadcast %41 : vector<8x1xf32> to vector<8x8xf32>
    %45 = vector.broadcast %34 : vector<1x8xf32> to vector<8x8xf32>
    %46 = arith.mulf %44, %45 : vector<8x8xf32>
    %47 = arith.subf %18, %46 : vector<8x8xf32>
    %48 = vector.shape_cast %43 : vector<8x1xi1> to vector<8x1xi1>
    %49 = vector.broadcast %48 : vector<8x1xi1> to vector<8x8xi1>
    %50 = vector.shape_cast %34 : vector<1x8xf32> to vector<1x8xf32>
    %51 = vector.broadcast %50 : vector<1x8xf32> to vector<8x8xf32>
    %52 = arith.select %49, %51, %47 : vector<8x8xi1>, vector<8x8xf32>
    %c0_i32_11 = arith.constant 0 : i32
    %53 = vector.broadcast %c0_i32_11 : i32 to vector<8x1xi32>
    %54 = arith.cmpi eq, %26, %53 : vector<8x1xi32>
    %55 = vector.broadcast %35 : vector<1x1xf32> to vector<8x1xf32>
    %56 = arith.mulf %41, %55 : vector<8x1xf32>
    %57 = arith.subf %25, %56 : vector<8x1xf32>
    %58 = vector.shape_cast %35 : vector<1x1xf32> to vector<1x1xf32>
    %59 = vector.broadcast %58 : vector<1x1xf32> to vector<8x1xf32>
    %60 = arith.select %54, %59, %57 : vector<8x1xi1>, vector<8x1xf32>
    %c0_i32_12 = arith.constant 0 : i32
    %61 = vector.broadcast %c0_i32_12 : i32 to vector<8x1xi32>
    %62 = arith.cmpi eq, %26, %61 : vector<8x1xi32>
    %63 = vector.broadcast %36 : vector<1x1xf32> to vector<8x1xf32>
    %64 = arith.mulf %41, %63 : vector<8x1xf32>
    %65 = arith.subf %27, %64 : vector<8x1xf32>
    %66 = vector.shape_cast %36 : vector<1x1xf32> to vector<1x1xf32>
    %67 = vector.broadcast %66 : vector<1x1xf32> to vector<8x1xf32>
    %68 = arith.select %62, %67, %65 : vector<8x1xi1>, vector<8x1xf32>
    %69 = vector.extract_strided_slice %52 {offsets = [1, 0], sizes = [1, 8], strides = [1, 1]} : vector<8x8xf32> to vector<1x8xf32>
    %70 = vector.extract_strided_slice %60 {offsets = [1, 0], sizes = [1, 1], strides = [1, 1]} : vector<8x1xf32> to vector<1x1xf32>
    %71 = vector.extract_strided_slice %68 {offsets = [1, 0], sizes = [1, 1], strides = [1, 1]} : vector<8x1xf32> to vector<1x1xf32>
    %72 = vector.extract_strided_slice %69 {offsets = [0, 1], sizes = [1, 1], strides = [1, 1]} : vector<1x8xf32> to vector<1x1xf32>
    %73 = tpu.reciprocal %72 : vector<1x1xf32> -> vector<1x1xf32>
    %74 = vector.broadcast %73 : vector<1x1xf32> to vector<1x8xf32>
    %75 = arith.mulf %69, %74 : vector<1x8xf32>
    %76 = arith.mulf %70, %73 : vector<1x1xf32>
    %77 = arith.mulf %71, %73 : vector<1x1xf32>
    %78 = vector.extract_strided_slice %52 {offsets = [0, 1], sizes = [8, 1], strides = [1, 1]} : vector<8x8xf32> to vector<8x1xf32>
    %c1_i32 = arith.constant 1 : i32
    %79 = vector.broadcast %c1_i32 : i32 to vector<8x1xi32>
    %80 = arith.cmpi eq, %26, %79 : vector<8x1xi32>
    %cst_13 = arith.constant 0.000000e+00 : f32
    %81 = vector.broadcast %cst_13 : f32 to vector<8x1xf32>
    %82 = arith.select %80, %81, %78 : vector<8x1xi1>, vector<8x1xf32>
    %c1_i32_14 = arith.constant 1 : i32
    %83 = vector.broadcast %c1_i32_14 : i32 to vector<8x1xi32>
    %84 = arith.cmpi eq, %26, %83 : vector<8x1xi32>
    %85 = vector.broadcast %82 : vector<8x1xf32> to vector<8x8xf32>
    %86 = vector.broadcast %75 : vector<1x8xf32> to vector<8x8xf32>
    %87 = arith.mulf %85, %86 : vector<8x8xf32>
    %88 = arith.subf %52, %87 : vector<8x8xf32>
    %89 = vector.shape_cast %84 : vector<8x1xi1> to vector<8x1xi1>
    %90 = vector.broadcast %89 : vector<8x1xi1> to vector<8x8xi1>
    %91 = vector.shape_cast %75 : vector<1x8xf32> to vector<1x8xf32>
    %92 = vector.broadcast %91 : vector<1x8xf32> to vector<8x8xf32>
    %93 = arith.select %90, %92, %88 : vector<8x8xi1>, vector<8x8xf32>
    %c1_i32_15 = arith.constant 1 : i32
    %94 = vector.broadcast %c1_i32_15 : i32 to vector<8x1xi32>
    %95 = arith.cmpi eq, %26, %94 : vector<8x1xi32>
    %96 = vector.broadcast %76 : vector<1x1xf32> to vector<8x1xf32>
    %97 = arith.mulf %82, %96 : vector<8x1xf32>
    %98 = arith.subf %60, %97 : vector<8x1xf32>
    %99 = vector.shape_cast %76 : vector<1x1xf32> to vector<1x1xf32>
    %100 = vector.broadcast %99 : vector<1x1xf32> to vector<8x1xf32>
    %101 = arith.select %95, %100, %98 : vector<8x1xi1>, vector<8x1xf32>
    %c1_i32_16 = arith.constant 1 : i32
    %102 = vector.broadcast %c1_i32_16 : i32 to vector<8x1xi32>
    %103 = arith.cmpi eq, %26, %102 : vector<8x1xi32>
    %104 = vector.broadcast %77 : vector<1x1xf32> to vector<8x1xf32>
    %105 = arith.mulf %82, %104 : vector<8x1xf32>
    %106 = arith.subf %68, %105 : vector<8x1xf32>
    %107 = vector.shape_cast %77 : vector<1x1xf32> to vector<1x1xf32>
    %108 = vector.broadcast %107 : vector<1x1xf32> to vector<8x1xf32>
    %109 = arith.select %103, %108, %106 : vector<8x1xi1>, vector<8x1xf32>
    %110 = vector.extract_strided_slice %93 {offsets = [2, 0], sizes = [1, 8], strides = [1, 1]} : vector<8x8xf32> to vector<1x8xf32>
    %111 = vector.extract_strided_slice %101 {offsets = [2, 0], sizes = [1, 1], strides = [1, 1]} : vector<8x1xf32> to vector<1x1xf32>
    %112 = vector.extract_strided_slice %109 {offsets = [2, 0], sizes = [1, 1], strides = [1, 1]} : vector<8x1xf32> to vector<1x1xf32>
    %113 = vector.extract_strided_slice %110 {offsets = [0, 2], sizes = [1, 1], strides = [1, 1]} : vector<1x8xf32> to vector<1x1xf32>
    %114 = tpu.reciprocal %113 : vector<1x1xf32> -> vector<1x1xf32>
    %115 = vector.broadcast %114 : vector<1x1xf32> to vector<1x8xf32>
    %116 = arith.mulf %110, %115 : vector<1x8xf32>
    %117 = arith.mulf %111, %114 : vector<1x1xf32>
    %118 = arith.mulf %112, %114 : vector<1x1xf32>
    %119 = vector.extract_strided_slice %93 {offsets = [0, 2], sizes = [8, 1], strides = [1, 1]} : vector<8x8xf32> to vector<8x1xf32>
    %c2_i32 = arith.constant 2 : i32
    %120 = vector.broadcast %c2_i32 : i32 to vector<8x1xi32>
    %121 = arith.cmpi eq, %26, %120 : vector<8x1xi32>
    %cst_17 = arith.constant 0.000000e+00 : f32
    %122 = vector.broadcast %cst_17 : f32 to vector<8x1xf32>
    %123 = arith.select %121, %122, %119 : vector<8x1xi1>, vector<8x1xf32>
    %c2_i32_18 = arith.constant 2 : i32
    %124 = vector.broadcast %c2_i32_18 : i32 to vector<8x1xi32>
    %125 = arith.cmpi eq, %26, %124 : vector<8x1xi32>
    %126 = vector.broadcast %123 : vector<8x1xf32> to vector<8x8xf32>
    %127 = vector.broadcast %116 : vector<1x8xf32> to vector<8x8xf32>
    %128 = arith.mulf %126, %127 : vector<8x8xf32>
    %129 = arith.subf %93, %128 : vector<8x8xf32>
    %130 = vector.shape_cast %125 : vector<8x1xi1> to vector<8x1xi1>
    %131 = vector.broadcast %130 : vector<8x1xi1> to vector<8x8xi1>
    %132 = vector.shape_cast %116 : vector<1x8xf32> to vector<1x8xf32>
    %133 = vector.broadcast %132 : vector<1x8xf32> to vector<8x8xf32>
    %134 = arith.select %131, %133, %129 : vector<8x8xi1>, vector<8x8xf32>
    %c2_i32_19 = arith.constant 2 : i32
    %135 = vector.broadcast %c2_i32_19 : i32 to vector<8x1xi32>
    %136 = arith.cmpi eq, %26, %135 : vector<8x1xi32>
    %137 = vector.broadcast %117 : vector<1x1xf32> to vector<8x1xf32>
    %138 = arith.mulf %123, %137 : vector<8x1xf32>
    %139 = arith.subf %101, %138 : vector<8x1xf32>
    %140 = vector.shape_cast %117 : vector<1x1xf32> to vector<1x1xf32>
    %141 = vector.broadcast %140 : vector<1x1xf32> to vector<8x1xf32>
    %142 = arith.select %136, %141, %139 : vector<8x1xi1>, vector<8x1xf32>
    %c2_i32_20 = arith.constant 2 : i32
    %143 = vector.broadcast %c2_i32_20 : i32 to vector<8x1xi32>
    %144 = arith.cmpi eq, %26, %143 : vector<8x1xi32>
    %145 = vector.broadcast %118 : vector<1x1xf32> to vector<8x1xf32>
    %146 = arith.mulf %123, %145 : vector<8x1xf32>
    %147 = arith.subf %109, %146 : vector<8x1xf32>
    %148 = vector.shape_cast %118 : vector<1x1xf32> to vector<1x1xf32>
    %149 = vector.broadcast %148 : vector<1x1xf32> to vector<8x1xf32>
    %150 = arith.select %144, %149, %147 : vector<8x1xi1>, vector<8x1xf32>
    %151 = vector.extract_strided_slice %134 {offsets = [3, 0], sizes = [1, 8], strides = [1, 1]} : vector<8x8xf32> to vector<1x8xf32>
    %152 = vector.extract_strided_slice %142 {offsets = [3, 0], sizes = [1, 1], strides = [1, 1]} : vector<8x1xf32> to vector<1x1xf32>
    %153 = vector.extract_strided_slice %150 {offsets = [3, 0], sizes = [1, 1], strides = [1, 1]} : vector<8x1xf32> to vector<1x1xf32>
    %154 = vector.extract_strided_slice %151 {offsets = [0, 3], sizes = [1, 1], strides = [1, 1]} : vector<1x8xf32> to vector<1x1xf32>
    %155 = tpu.reciprocal %154 : vector<1x1xf32> -> vector<1x1xf32>
    %156 = vector.broadcast %155 : vector<1x1xf32> to vector<1x8xf32>
    %157 = arith.mulf %151, %156 : vector<1x8xf32>
    %158 = arith.mulf %152, %155 : vector<1x1xf32>
    %159 = arith.mulf %153, %155 : vector<1x1xf32>
    %160 = vector.extract_strided_slice %134 {offsets = [0, 3], sizes = [8, 1], strides = [1, 1]} : vector<8x8xf32> to vector<8x1xf32>
    %c3_i32 = arith.constant 3 : i32
    %161 = vector.broadcast %c3_i32 : i32 to vector<8x1xi32>
    %162 = arith.cmpi eq, %26, %161 : vector<8x1xi32>
    %cst_21 = arith.constant 0.000000e+00 : f32
    %163 = vector.broadcast %cst_21 : f32 to vector<8x1xf32>
    %164 = arith.select %162, %163, %160 : vector<8x1xi1>, vector<8x1xf32>
    %c3_i32_22 = arith.constant 3 : i32
    %165 = vector.broadcast %c3_i32_22 : i32 to vector<8x1xi32>
    %166 = arith.cmpi eq, %26, %165 : vector<8x1xi32>
    %167 = vector.broadcast %164 : vector<8x1xf32> to vector<8x8xf32>
    %168 = vector.broadcast %157 : vector<1x8xf32> to vector<8x8xf32>
    %169 = arith.mulf %167, %168 : vector<8x8xf32>
    %170 = arith.subf %134, %169 : vector<8x8xf32>
    %171 = vector.shape_cast %166 : vector<8x1xi1> to vector<8x1xi1>
    %172 = vector.broadcast %171 : vector<8x1xi1> to vector<8x8xi1>
    %173 = vector.shape_cast %157 : vector<1x8xf32> to vector<1x8xf32>
    %174 = vector.broadcast %173 : vector<1x8xf32> to vector<8x8xf32>
    %175 = arith.select %172, %174, %170 : vector<8x8xi1>, vector<8x8xf32>
    %c3_i32_23 = arith.constant 3 : i32
    %176 = vector.broadcast %c3_i32_23 : i32 to vector<8x1xi32>
    %177 = arith.cmpi eq, %26, %176 : vector<8x1xi32>
    %178 = vector.broadcast %158 : vector<1x1xf32> to vector<8x1xf32>
    %179 = arith.mulf %164, %178 : vector<8x1xf32>
    %180 = arith.subf %142, %179 : vector<8x1xf32>
    %181 = vector.shape_cast %158 : vector<1x1xf32> to vector<1x1xf32>
    %182 = vector.broadcast %181 : vector<1x1xf32> to vector<8x1xf32>
    %183 = arith.select %177, %182, %180 : vector<8x1xi1>, vector<8x1xf32>
    %c3_i32_24 = arith.constant 3 : i32
    %184 = vector.broadcast %c3_i32_24 : i32 to vector<8x1xi32>
    %185 = arith.cmpi eq, %26, %184 : vector<8x1xi32>
    %186 = vector.broadcast %159 : vector<1x1xf32> to vector<8x1xf32>
    %187 = arith.mulf %164, %186 : vector<8x1xf32>
    %188 = arith.subf %150, %187 : vector<8x1xf32>
    %189 = vector.shape_cast %159 : vector<1x1xf32> to vector<1x1xf32>
    %190 = vector.broadcast %189 : vector<1x1xf32> to vector<8x1xf32>
    %191 = arith.select %185, %190, %188 : vector<8x1xi1>, vector<8x1xf32>
    %192 = vector.extract_strided_slice %175 {offsets = [4, 0], sizes = [1, 8], strides = [1, 1]} : vector<8x8xf32> to vector<1x8xf32>
    %193 = vector.extract_strided_slice %183 {offsets = [4, 0], sizes = [1, 1], strides = [1, 1]} : vector<8x1xf32> to vector<1x1xf32>
    %194 = vector.extract_strided_slice %191 {offsets = [4, 0], sizes = [1, 1], strides = [1, 1]} : vector<8x1xf32> to vector<1x1xf32>
    %195 = vector.extract_strided_slice %192 {offsets = [0, 4], sizes = [1, 1], strides = [1, 1]} : vector<1x8xf32> to vector<1x1xf32>
    %196 = tpu.reciprocal %195 : vector<1x1xf32> -> vector<1x1xf32>
    %197 = vector.broadcast %196 : vector<1x1xf32> to vector<1x8xf32>
    %198 = arith.mulf %192, %197 : vector<1x8xf32>
    %199 = arith.mulf %193, %196 : vector<1x1xf32>
    %200 = arith.mulf %194, %196 : vector<1x1xf32>
    %201 = vector.extract_strided_slice %175 {offsets = [0, 4], sizes = [8, 1], strides = [1, 1]} : vector<8x8xf32> to vector<8x1xf32>
    %c4_i32 = arith.constant 4 : i32
    %202 = vector.broadcast %c4_i32 : i32 to vector<8x1xi32>
    %203 = arith.cmpi eq, %26, %202 : vector<8x1xi32>
    %cst_25 = arith.constant 0.000000e+00 : f32
    %204 = vector.broadcast %cst_25 : f32 to vector<8x1xf32>
    %205 = arith.select %203, %204, %201 : vector<8x1xi1>, vector<8x1xf32>
    %c4_i32_26 = arith.constant 4 : i32
    %206 = vector.broadcast %c4_i32_26 : i32 to vector<8x1xi32>
    %207 = arith.cmpi eq, %26, %206 : vector<8x1xi32>
    %208 = vector.broadcast %205 : vector<8x1xf32> to vector<8x8xf32>
    %209 = vector.broadcast %198 : vector<1x8xf32> to vector<8x8xf32>
    %210 = arith.mulf %208, %209 : vector<8x8xf32>
    %211 = arith.subf %175, %210 : vector<8x8xf32>
    %212 = vector.shape_cast %207 : vector<8x1xi1> to vector<8x1xi1>
    %213 = vector.broadcast %212 : vector<8x1xi1> to vector<8x8xi1>
    %214 = vector.shape_cast %198 : vector<1x8xf32> to vector<1x8xf32>
    %215 = vector.broadcast %214 : vector<1x8xf32> to vector<8x8xf32>
    %216 = arith.select %213, %215, %211 : vector<8x8xi1>, vector<8x8xf32>
    %c4_i32_27 = arith.constant 4 : i32
    %217 = vector.broadcast %c4_i32_27 : i32 to vector<8x1xi32>
    %218 = arith.cmpi eq, %26, %217 : vector<8x1xi32>
    %219 = vector.broadcast %199 : vector<1x1xf32> to vector<8x1xf32>
    %220 = arith.mulf %205, %219 : vector<8x1xf32>
    %221 = arith.subf %183, %220 : vector<8x1xf32>
    %222 = vector.shape_cast %199 : vector<1x1xf32> to vector<1x1xf32>
    %223 = vector.broadcast %222 : vector<1x1xf32> to vector<8x1xf32>
    %224 = arith.select %218, %223, %221 : vector<8x1xi1>, vector<8x1xf32>
    %c4_i32_28 = arith.constant 4 : i32
    %225 = vector.broadcast %c4_i32_28 : i32 to vector<8x1xi32>
    %226 = arith.cmpi eq, %26, %225 : vector<8x1xi32>
    %227 = vector.broadcast %200 : vector<1x1xf32> to vector<8x1xf32>
    %228 = arith.mulf %205, %227 : vector<8x1xf32>
    %229 = arith.subf %191, %228 : vector<8x1xf32>
    %230 = vector.shape_cast %200 : vector<1x1xf32> to vector<1x1xf32>
    %231 = vector.broadcast %230 : vector<1x1xf32> to vector<8x1xf32>
    %232 = arith.select %226, %231, %229 : vector<8x1xi1>, vector<8x1xf32>
    %233 = vector.extract_strided_slice %216 {offsets = [5, 0], sizes = [1, 8], strides = [1, 1]} : vector<8x8xf32> to vector<1x8xf32>
    %234 = vector.extract_strided_slice %224 {offsets = [5, 0], sizes = [1, 1], strides = [1, 1]} : vector<8x1xf32> to vector<1x1xf32>
    %235 = vector.extract_strided_slice %232 {offsets = [5, 0], sizes = [1, 1], strides = [1, 1]} : vector<8x1xf32> to vector<1x1xf32>
    %236 = vector.extract_strided_slice %233 {offsets = [0, 5], sizes = [1, 1], strides = [1, 1]} : vector<1x8xf32> to vector<1x1xf32>
    %237 = tpu.reciprocal %236 : vector<1x1xf32> -> vector<1x1xf32>
    %238 = vector.broadcast %237 : vector<1x1xf32> to vector<1x8xf32>
    %239 = arith.mulf %233, %238 : vector<1x8xf32>
    %240 = arith.mulf %234, %237 : vector<1x1xf32>
    %241 = arith.mulf %235, %237 : vector<1x1xf32>
    %242 = vector.extract_strided_slice %216 {offsets = [0, 5], sizes = [8, 1], strides = [1, 1]} : vector<8x8xf32> to vector<8x1xf32>
    %c5_i32 = arith.constant 5 : i32
    %243 = vector.broadcast %c5_i32 : i32 to vector<8x1xi32>
    %244 = arith.cmpi eq, %26, %243 : vector<8x1xi32>
    %cst_29 = arith.constant 0.000000e+00 : f32
    %245 = vector.broadcast %cst_29 : f32 to vector<8x1xf32>
    %246 = arith.select %244, %245, %242 : vector<8x1xi1>, vector<8x1xf32>
    %c5_i32_30 = arith.constant 5 : i32
    %247 = vector.broadcast %c5_i32_30 : i32 to vector<8x1xi32>
    %248 = arith.cmpi eq, %26, %247 : vector<8x1xi32>
    %249 = vector.broadcast %246 : vector<8x1xf32> to vector<8x8xf32>
    %250 = vector.broadcast %239 : vector<1x8xf32> to vector<8x8xf32>
    %251 = arith.mulf %249, %250 : vector<8x8xf32>
    %252 = arith.subf %216, %251 : vector<8x8xf32>
    %253 = vector.shape_cast %248 : vector<8x1xi1> to vector<8x1xi1>
    %254 = vector.broadcast %253 : vector<8x1xi1> to vector<8x8xi1>
    %255 = vector.shape_cast %239 : vector<1x8xf32> to vector<1x8xf32>
    %256 = vector.broadcast %255 : vector<1x8xf32> to vector<8x8xf32>
    %257 = arith.select %254, %256, %252 : vector<8x8xi1>, vector<8x8xf32>
    %c5_i32_31 = arith.constant 5 : i32
    %258 = vector.broadcast %c5_i32_31 : i32 to vector<8x1xi32>
    %259 = arith.cmpi eq, %26, %258 : vector<8x1xi32>
    %260 = vector.broadcast %240 : vector<1x1xf32> to vector<8x1xf32>
    %261 = arith.mulf %246, %260 : vector<8x1xf32>
    %262 = arith.subf %224, %261 : vector<8x1xf32>
    %263 = vector.shape_cast %240 : vector<1x1xf32> to vector<1x1xf32>
    %264 = vector.broadcast %263 : vector<1x1xf32> to vector<8x1xf32>
    %265 = arith.select %259, %264, %262 : vector<8x1xi1>, vector<8x1xf32>
    %c5_i32_32 = arith.constant 5 : i32
    %266 = vector.broadcast %c5_i32_32 : i32 to vector<8x1xi32>
    %267 = arith.cmpi eq, %26, %266 : vector<8x1xi32>
    %268 = vector.broadcast %241 : vector<1x1xf32> to vector<8x1xf32>
    %269 = arith.mulf %246, %268 : vector<8x1xf32>
    %270 = arith.subf %232, %269 : vector<8x1xf32>
    %271 = vector.shape_cast %241 : vector<1x1xf32> to vector<1x1xf32>
    %272 = vector.broadcast %271 : vector<1x1xf32> to vector<8x1xf32>
    %273 = arith.select %267, %272, %270 : vector<8x1xi1>, vector<8x1xf32>
    %274 = vector.extract_strided_slice %257 {offsets = [6, 0], sizes = [1, 8], strides = [1, 1]} : vector<8x8xf32> to vector<1x8xf32>
    %275 = vector.extract_strided_slice %265 {offsets = [6, 0], sizes = [1, 1], strides = [1, 1]} : vector<8x1xf32> to vector<1x1xf32>
    %276 = vector.extract_strided_slice %273 {offsets = [6, 0], sizes = [1, 1], strides = [1, 1]} : vector<8x1xf32> to vector<1x1xf32>
    %277 = vector.extract_strided_slice %274 {offsets = [0, 6], sizes = [1, 1], strides = [1, 1]} : vector<1x8xf32> to vector<1x1xf32>
    %278 = tpu.reciprocal %277 : vector<1x1xf32> -> vector<1x1xf32>
    %279 = vector.broadcast %278 : vector<1x1xf32> to vector<1x8xf32>
    %280 = arith.mulf %274, %279 : vector<1x8xf32>
    %281 = arith.mulf %275, %278 : vector<1x1xf32>
    %282 = arith.mulf %276, %278 : vector<1x1xf32>
    %283 = vector.extract_strided_slice %257 {offsets = [0, 6], sizes = [8, 1], strides = [1, 1]} : vector<8x8xf32> to vector<8x1xf32>
    %c6_i32 = arith.constant 6 : i32
    %284 = vector.broadcast %c6_i32 : i32 to vector<8x1xi32>
    %285 = arith.cmpi eq, %26, %284 : vector<8x1xi32>
    %cst_33 = arith.constant 0.000000e+00 : f32
    %286 = vector.broadcast %cst_33 : f32 to vector<8x1xf32>
    %287 = arith.select %285, %286, %283 : vector<8x1xi1>, vector<8x1xf32>
    %c6_i32_34 = arith.constant 6 : i32
    %288 = vector.broadcast %c6_i32_34 : i32 to vector<8x1xi32>
    %289 = arith.cmpi eq, %26, %288 : vector<8x1xi32>
    %290 = vector.broadcast %287 : vector<8x1xf32> to vector<8x8xf32>
    %291 = vector.broadcast %280 : vector<1x8xf32> to vector<8x8xf32>
    %292 = arith.mulf %290, %291 : vector<8x8xf32>
    %293 = arith.subf %257, %292 : vector<8x8xf32>
    %294 = vector.shape_cast %289 : vector<8x1xi1> to vector<8x1xi1>
    %295 = vector.broadcast %294 : vector<8x1xi1> to vector<8x8xi1>
    %296 = vector.shape_cast %280 : vector<1x8xf32> to vector<1x8xf32>
    %297 = vector.broadcast %296 : vector<1x8xf32> to vector<8x8xf32>
    %298 = arith.select %295, %297, %293 : vector<8x8xi1>, vector<8x8xf32>
    %c6_i32_35 = arith.constant 6 : i32
    %299 = vector.broadcast %c6_i32_35 : i32 to vector<8x1xi32>
    %300 = arith.cmpi eq, %26, %299 : vector<8x1xi32>
    %301 = vector.broadcast %281 : vector<1x1xf32> to vector<8x1xf32>
    %302 = arith.mulf %287, %301 : vector<8x1xf32>
    %303 = arith.subf %265, %302 : vector<8x1xf32>
    %304 = vector.shape_cast %281 : vector<1x1xf32> to vector<1x1xf32>
    %305 = vector.broadcast %304 : vector<1x1xf32> to vector<8x1xf32>
    %306 = arith.select %300, %305, %303 : vector<8x1xi1>, vector<8x1xf32>
    %c6_i32_36 = arith.constant 6 : i32
    %307 = vector.broadcast %c6_i32_36 : i32 to vector<8x1xi32>
    %308 = arith.cmpi eq, %26, %307 : vector<8x1xi32>
    %309 = vector.broadcast %282 : vector<1x1xf32> to vector<8x1xf32>
    %310 = arith.mulf %287, %309 : vector<8x1xf32>
    %311 = arith.subf %273, %310 : vector<8x1xf32>
    %312 = vector.shape_cast %282 : vector<1x1xf32> to vector<1x1xf32>
    %313 = vector.broadcast %312 : vector<1x1xf32> to vector<8x1xf32>
    %314 = arith.select %308, %313, %311 : vector<8x1xi1>, vector<8x1xf32>
    %315 = vector.extract_strided_slice %298 {offsets = [7, 0], sizes = [1, 8], strides = [1, 1]} : vector<8x8xf32> to vector<1x8xf32>
    %316 = vector.extract_strided_slice %306 {offsets = [7, 0], sizes = [1, 1], strides = [1, 1]} : vector<8x1xf32> to vector<1x1xf32>
    %317 = vector.extract_strided_slice %314 {offsets = [7, 0], sizes = [1, 1], strides = [1, 1]} : vector<8x1xf32> to vector<1x1xf32>
    %318 = vector.extract_strided_slice %315 {offsets = [0, 7], sizes = [1, 1], strides = [1, 1]} : vector<1x8xf32> to vector<1x1xf32>
    %319 = tpu.reciprocal %318 : vector<1x1xf32> -> vector<1x1xf32>
    %320 = arith.mulf %316, %319 : vector<1x1xf32>
    %321 = arith.mulf %317, %319 : vector<1x1xf32>
    %322 = vector.extract_strided_slice %298 {offsets = [0, 7], sizes = [8, 1], strides = [1, 1]} : vector<8x8xf32> to vector<8x1xf32>
    %c7_i32 = arith.constant 7 : i32
    %323 = vector.broadcast %c7_i32 : i32 to vector<8x1xi32>
    %324 = arith.cmpi eq, %26, %323 : vector<8x1xi32>
    %cst_37 = arith.constant 0.000000e+00 : f32
    %325 = vector.broadcast %cst_37 : f32 to vector<8x1xf32>
    %326 = arith.select %324, %325, %322 : vector<8x1xi1>, vector<8x1xf32>
    %c7_i32_38 = arith.constant 7 : i32
    %327 = vector.broadcast %c7_i32_38 : i32 to vector<8x1xi32>
    %328 = arith.cmpi eq, %26, %327 : vector<8x1xi32>
    %329 = vector.broadcast %320 : vector<1x1xf32> to vector<8x1xf32>
    %330 = arith.mulf %326, %329 : vector<8x1xf32>
    %331 = arith.subf %306, %330 : vector<8x1xf32>
    %332 = vector.shape_cast %320 : vector<1x1xf32> to vector<1x1xf32>
    %333 = vector.broadcast %332 : vector<1x1xf32> to vector<8x1xf32>
    %334 = arith.select %328, %333, %331 : vector<8x1xi1>, vector<8x1xf32>
    %c7_i32_39 = arith.constant 7 : i32
    %335 = vector.broadcast %c7_i32_39 : i32 to vector<8x1xi32>
    %336 = arith.cmpi eq, %26, %335 : vector<8x1xi32>
    %337 = vector.broadcast %321 : vector<1x1xf32> to vector<8x1xf32>
    %338 = arith.mulf %326, %337 : vector<8x1xf32>
    %339 = arith.subf %314, %338 : vector<8x1xf32>
    %340 = vector.shape_cast %321 : vector<1x1xf32> to vector<1x1xf32>
    %341 = vector.broadcast %340 : vector<1x1xf32> to vector<8x1xf32>
    %342 = arith.select %336, %341, %339 : vector<8x1xi1>, vector<8x1xf32>
    %cst_40 = arith.constant dense<0.000000e+00> : vector<1xf32>
    %343 = vector.multi_reduction <add>, %334, %cst_40 [0] : vector<8x1xf32> to vector<1xf32>
    %344 = vector.shape_cast %343 : vector<1xf32> to vector<1x1xf32>
    %cst_41 = arith.constant dense<0.000000e+00> : vector<1xf32>
    %345 = vector.multi_reduction <add>, %342, %cst_41 [0] : vector<8x1xf32> to vector<1xf32>
    %346 = vector.shape_cast %345 : vector<1xf32> to vector<1x1xf32>
    %cst_42 = arith.constant 2.000000e+00 : f32
    %347 = vector.broadcast %cst_42 : f32 to vector<1x1xf32>
    %348 = arith.subf %344, %347 : vector<1x1xf32>
    %349 = tpu.reciprocal %346 : vector<1x1xf32> -> vector<1x1xf32>
    %350 = arith.mulf %348, %349 : vector<1x1xf32>
    %351 = vector.broadcast %350 : vector<1x1xf32> to vector<8x1xf32>
    %352 = arith.mulf %351, %342 : vector<8x1xf32>
    %353 = arith.subf %334, %352 : vector<8x1xf32>
    %cst_43 = arith.constant 5.000000e-01 : f32
    %354 = vector.broadcast %cst_43 : f32 to vector<8x1xf32>
    %355 = arith.mulf %354, %353 : vector<8x1xf32>
    %356 = tpu.reciprocal %5 : vector<1x1xf32> -> vector<1x1xf32>
    %357 = vector.broadcast %356 : vector<1x1xf32> to vector<8x1xf32>
    %358 = arith.mulf %355, %357 : vector<8x1xf32>
    %cst_44 = arith.constant dense<0xFF800000> : vector<1xf32>
    %359 = vector.multi_reduction <maximumf>, %358, %cst_44 [0] : vector<8x1xf32> to vector<1xf32>
    %360 = vector.shape_cast %359 : vector<1xf32> to vector<1x1xf32>
    %361 = vector.broadcast %360 : vector<1x1xf32> to vector<8x1xf32>
    %362 = arith.subf %358, %361 : vector<8x1xf32>
    %363 = math.exp %362 : vector<8x1xf32>
    %cst_45 = arith.constant dense<0.000000e+00> : vector<1xf32>
    %364 = vector.multi_reduction <add>, %363, %cst_45 [0] : vector<8x1xf32> to vector<1xf32>
    %365 = vector.shape_cast %364 : vector<1xf32> to vector<1x1xf32>
    %366 = tpu.reciprocal %365 : vector<1x1xf32> -> vector<1x1xf32>
    %367 = vector.broadcast %366 : vector<1x1xf32> to vector<8x1xf32>
    %368 = arith.mulf %363, %367 : vector<8x1xf32>
    %369 = tpu.iota {dimensions = array<i32: 0>} : vector<8x128xi32>
    %370 = tpu.iota {dimensions = array<i32: 1>} : vector<8x128xi32>
    %c8_i32 = arith.constant 8 : i32
    %c0_i32_46 = arith.constant 0 : i32
    %371 = arith.cmpi eq, %c8_i32, %c0_i32_46 : i32
    %c1_i32_47 = arith.constant 1 : i32
    %372 = arith.select %371, %c1_i32_47, %c8_i32 : i32
    %373 = vector.broadcast %372 : i32 to vector<8x128xi32>
    %374 = arith.remsi %370, %373 : vector<8x128xi32>
    %c0_i32_48 = arith.constant 0 : i32
    %375 = vector.broadcast %c0_i32_48 : i32 to vector<8x128xi32>
    %376 = arith.cmpi ne, %374, %375 : vector<8x128xi32>
    %c0_i32_49 = arith.constant 0 : i32
    %377 = vector.broadcast %c0_i32_49 : i32 to vector<8x128xi32>
    %378 = arith.cmpi slt, %374, %377 : vector<8x128xi32>
    %c0_i32_50 = arith.constant 0 : i32
    %379 = arith.cmpi slt, %372, %c0_i32_50 : i32
    %380 = vector.broadcast %379 : i1 to vector<8x128xi1>
    %381 = vector.broadcast %380 : vector<8x128xi1> to vector<8x128xi1>
    %382 = arith.xori %378, %381 : vector<8x128xi1>
    %383 = arith.andi %382, %376 : vector<8x128xi1>
    %384 = vector.broadcast %372 : i32 to vector<8x128xi32>
    %385 = arith.addi %374, %384 : vector<8x128xi32>
    %386 = arith.select %383, %385, %374 : vector<8x128xi1>, vector<8x128xi32>
    %387 = arith.cmpi eq, %386, %369 : vector<8x128xi32>
    %388 = arith.extui %387 : vector<8x128xi1> to vector<8x128xi32>
    %389 = arith.sitofp %388 : vector<8x128xi32> to vector<8x128xf32>
    %390 = vector.broadcast %368 : vector<8x1xf32> to vector<8x128xf32>
    %391 = arith.mulf %389, %390 : vector<8x128xf32>
    %cst_51 = arith.constant dense<0.000000e+00> : vector<128xf32>
    %392 = vector.multi_reduction <add>, %391, %cst_51 [0] : vector<8x128xf32> to vector<128xf32>
    %393 = vector.shape_cast %392 : vector<128xf32> to vector<1x128xf32>
    %c0_52 = arith.constant 0 : index
    %c0_53 = arith.constant 0 : index
    %394 = vector.load %arg4[%c0_52, %c0_53] : memref<1x128xf32, #tpu.memory_space<vmem>>, vector<1x128xf32>
    tpu.vector_store %arg4[%c0_52, %c0_53], %393 {strides = array<i32>} : memref<1x128xf32, #tpu.memory_space<vmem>>, vector<1x128xf32>,
    return
  }
  func.func @transform_0(%arg0: i32) -> (i32, i32) {
    %c0_i32 = arith.constant 0 : i32
    %c0_i32_0 = arith.constant 0 : i32
    %c0_i32_1 = arith.constant 0 : i32
    return %c0_i32, %c0_i32_0 : i32, i32
  }
  func.func @transform_1(%arg0: i32) -> (i32, i32) {
    %c0_i32 = arith.constant 0 : i32
    %c0_i32_0 = arith.constant 0 : i32
    %c0_i32_1 = arith.constant 0 : i32
    return %c0_i32, %c0_i32_0 : i32, i32
  }
  func.func @transform_2(%arg0: i32) -> (i32, i32) {
    %c0_i32 = arith.constant 0 : i32
    %c0_i32_0 = arith.constant 0 : i32
    %c0_i32_1 = arith.constant 0 : i32
    return %c0_i32, %c0_i32_0 : i32, i32
  }
  func.func @transform_3(%arg0: i32) -> (i32, i32) {
    %c0_i32 = arith.constant 0 : i32
    %c0_i32_0 = arith.constant 0 : i32
    %c0_i32_1 = arith.constant 0 : i32
    return %c0_i32, %c0_i32_0 : i32, i32
  }
}

</mosaic_0001>

<llo_original>
// kernel: tpu_custom_call.1
$region0: #{tpu_custom_call.1}
  #allocation0 [shape = 'u32[]', space=smem, size = 0x4, offset = 0x4, fixed_abs, tag = 'smem constant byte address 0x4 - core index']
  #allocation1 [shape = 'u32[144,128]{1,0:T(1,128)}', space=vmem, size = 0x12000, scoped, tag = 'internal scratch']
  %s0 = inlined_call_operand.hbm [shape: f32[8,8], index: 0, kind: input, shape index: {}]
  %s1 = inlined_call_operand.vmem [shape: f32[1,8], index: 1, kind: input, shape index: {}]
  %s2 = inlined_call_operand.vmem [shape: f32[1,3], index: 2, kind: input, shape index: {}]
  %s3 = inlined_call_operand.hbm [shape: f32[1,128], index: 3, kind: output, shape index: {}]
  %s4 = sld [smem:[#allocation0]]
  $region26: #{tpu_custom_call.1} parent=0
    _
  %s6 = ssub.s32 1, %s4
  %s7 = scalar_select 0, %s6, %s4
  $region1: #{tpu_custom_call.1} parent=0
    #allocation2 [shape = 'u8[4096]{0}', space=vmem, size = 0x1000, scoped, tag = 'input window, operand 0, single buffered']
    #allocation3 [shape = 's32[1]{0}', space=sflag, size = 0x4, scoped, tag = 'scoped memory for tpu_custom_call.1']
    #allocation4 [shape = 's32[1]{0}', space=sflag, size = 0x4, scoped, tag = 'scoped memory for tpu_custom_call.1']
    #allocation5 [shape = 'u8[512]{0}', space=vmem, size = 0x400, scoped, tag = 'output window, operand 0, single buffered']
    %8 = vsyncpa [#allocation3], 0
    %9 = vsyncpa [#allocation4], 0
    // Predicated region
    $region2: #{tpu_custom_call.1} parent=1 // pred_check
      _
    $region3: #{tpu_custom_call.1} parent=1 // pred_check_branch
      %11 = sbr.rel (0) target = $region5
    $region4: #{tpu_custom_call.1} parent=1 // pred_region
      %s13 = ssub.s32 128, 128
      %14 = vsyncadd [#allocation3], %s13
      %s16 = sshll.u32 [#allocation2], 4
      %s17 = int_to_ptr.vmem [resolvable:$true] %s16
      %19 = dma.hbm_to_vmem [thread:$0]  %s0, 128, %s17, [#allocation3]
    $region5: #{tpu_custom_call.1} parent=1 // pred_fallthru
      _
    // Predicated region
    $region6: #{tpu_custom_call.1} parent=1 // pred_check
      _
    $region7: #{tpu_custom_call.1} parent=1 // pred_check_branch
      %21 = sbr.rel (0) target = $region9
    $region8: #{tpu_custom_call.1} parent=1 // pred_region
      _
    $region9: #{tpu_custom_call.1} parent=1 // pred_fallthru
      _
    // Predicated region
    $region10: #{tpu_custom_call.1} parent=1 // pred_check
      _
    $region11: #{tpu_custom_call.1} parent=1 // pred_check_branch
      %23 = sbr.rel (0) target = $region13
    $region12: #{tpu_custom_call.1} parent=1 // pred_region
      _
    $region13: #{tpu_custom_call.1} parent=1 // pred_fallthru
      _
    // Predicated region
    $region14: #{tpu_custom_call.1} parent=1 // pred_check
      _
    $region15: #{tpu_custom_call.1} parent=1 // pred_check_branch
      %25 = sbr.rel (0) target = $region17
    $region16: #{tpu_custom_call.1} parent=1 // pred_region
      %26 = dma.done [#allocation3], 128
    $region17: #{tpu_custom_call.1} parent=1 // pred_fallthru
      _
    %v27 = vld [vmem:[#allocation2] sm:$0xff]
    %v28 = vld [vmem:[%s2] sm:$0x1]
    %v29 = vand.u32 2147483647, %v28
    %vm30 = vcmask 64512
    %v32 = vsel %vm30, %v27, 0
    %34 = vmatprep.subr.mxu0 0.0
    %35 = vmatpush1.xpose.msra.mxu0 %v32
    %36 = vmatprep.subr.mxu0 0.0
    %37 = vmatpush1.xpose.msra.mxu0 0.0
    %38 = vmatprep.subr.mxu0 0.0
    %39 = vmatpush1.xpose.msra.mxu0 0.0
    %40 = vmatprep.subr.mxu0 0.0
    %41 = vmatpush1.xpose.msra.mxu0 0.0
    %42 = vmatprep.subr.mxu0 0.0
    %43 = vmatpush1.xpose.msra.mxu0 0.0
    %44 = vmatprep.subr.mxu0 0.0
    %45 = vmatpush1.xpose.msra.mxu0 0.0
    %46 = vmatprep.subr.mxu0 0.0
    %47 = vmatpush1.xpose.msra.mxu0 0.0
    %48 = vmatprep.subr.mxu0 0.0
    %49 = vmatpush1.xpose.msra.mxu0 0.0
    %50 = vmatprep.subr.mxu0 0.0
    %51 = vmatpush1.xpose.msra.mxu0 0.0
    %52 = vmatprep.subr.mxu0 0.0
    %53 = vmatpush1.xpose.msra.mxu0 0.0
    %54 = vmatprep.subr.mxu0 0.0
    %55 = vmatpush1.xpose.msra.mxu0 0.0
    %56 = vmatprep.subr.mxu0 0.0
    %57 = vmatpush1.xpose.msra.mxu0 0.0
    %58 = vmatprep.subr.mxu0 0.0
    %59 = vmatpush1.xpose.msra.mxu0 0.0
    %60 = vmatprep.subr.mxu0 0.0
    %61 = vmatpush1.xpose.msra.mxu0 0.0
    %62 = vmatprep.subr.mxu0 0.0
    %63 = vmatpush1.xpose.msra.mxu0 0.0
    %64 = vmatprep.subr.mxu0 0.0
    %65 = vmatpush1.xpose.msra.mxu0 0.0
    %66 = vmatprep.subr.mxu0 0.0
    %67 = vmatpush1.xpose.msra.mxu0 0.0
    %68 = vmatprep.subr.mxu0 0.0
    %69 = vmatpush1.xpose.msra.mxu0 0.0
    %70 = vmatprep.subr.mxu0 0.0
    %71 = vmatpush1.xpose.msra.mxu0 0.0
    %72 = vmatprep.subr.mxu0 0.0
    %73 = vmatpush1.xpose.msra.mxu0 0.0
    %74 = vmatprep.subr.mxu0 0.0
    %75 = vmatpush1.xpose.msra.mxu0 0.0
    %76 = vmatprep.subr.mxu0 0.0
    %77 = vmatpush1.xpose.msra.mxu0 0.0
    %78 = vmatprep.subr.mxu0 0.0
    %79 = vmatpush1.xpose.msra.mxu0 0.0
    %80 = vmatprep.subr.mxu0 0.0
    %81 = vmatpush1.xpose.msra.mxu0 0.0
    %82 = vmatprep.subr.mxu0 0.0
    %83 = vmatpush1.xpose.msra.mxu0 0.0
    %84 = vmatprep.subr.mxu0 0.0
    %85 = vmatpush1.xpose.msra.mxu0 0.0
    %86 = vmatprep.subr.mxu0 0.0
    %87 = vmatpush1.xpose.msra.mxu0 0.0
    %88 = vmatprep.subr.mxu0 0.0
    %89 = vmatpush1.xpose.msra.mxu0 0.0
    %90 = vmatprep.subr.mxu0 0.0
    %91 = vmatpush1.xpose.msra.mxu0 0.0
    %92 = vmatprep.subr.mxu0 0.0
    %93 = vmatpush1.xpose.msra.mxu0 0.0
    %94 = vmatprep.subr.mxu0 0.0
    %95 = vmatpush1.xpose.msra.mxu0 0.0
    %96 = vmatprep.subr.mxu0 0.0
    %97 = vmatpush1.xpose.msra.mxu0 0.0
    %98 = vmatprep.mubr.f32.mxu0 0.0
    %99 = vmatmul.mubr.f32.gmra.mrb[0].mxu0 %v32
    %v100 = vpop.f32.mrb[0].mxu0
    %v101 = vadd.f32 0.0, %v100
    %v102 = vpop.f32.mrb[0].mxu0
    %103 = vdwg.mxu0
    %v105 = vsel %vm30, %v101, 0
    %107 = vmatprep.subr.mxu0 0.0
    %108 = vmatpush1.msra.mxu0 %v101
    %109 = vmatprep.subr.mxu0 0.0
    %110 = vmatpush1.msra.mxu0 0.0
    %111 = vmatprep.subr.mxu0 0.0
    %112 = vmatpush1.msra.mxu0 0.0
    %113 = vmatprep.subr.mxu0 0.0
    %114 = vmatpush1.msra.mxu0 0.0
    %115 = vmatprep.subr.mxu0 0.0
    %116 = vmatpush1.msra.mxu0 0.0
    %117 = vmatprep.subr.mxu0 0.0
    %118 = vmatpush1.msra.mxu0 0.0
    %119 = vmatprep.subr.mxu0 0.0
    %120 = vmatpush1.msra.mxu0 0.0
    %121 = vmatprep.subr.mxu0 0.0
    %122 = vmatpush1.msra.mxu0 0.0
    %123 = vmatprep.subr.mxu0 0.0
    %124 = vmatpush1.msra.mxu0 0.0
    %125 = vmatprep.subr.mxu0 0.0
    %126 = vmatpush1.msra.mxu0 0.0
    %127 = vmatprep.subr.mxu0 0.0
    %128 = vmatpush1.msra.mxu0 0.0
    %129 = vmatprep.subr.mxu0 0.0
    %130 = vmatpush1.msra.mxu0 0.0
    %131 = vmatprep.subr.mxu0 0.0
    %132 = vmatpush1.msra.mxu0 0.0
    %133 = vmatprep.subr.mxu0 0.0
    %134 = vmatpush1.msra.mxu0 0.0
    %135 = vmatprep.subr.mxu0 0.0
    %136 = vmatpush1.msra.mxu0 0.0
    %137 = vmatprep.subr.mxu0 0.0
    %138 = vmatpush1.msra.mxu0 0.0
    %139 = vmatprep.subr.mxu0 0.0
    %140 = vmatpush1.msra.mxu0 0.0
    %141 = vmatprep.subr.mxu0 0.0
    %142 = vmatpush1.msra.mxu0 0.0
    %143 = vmatprep.subr.mxu0 0.0
    %144 = vmatpush1.msra.mxu0 0.0
    %145 = vmatprep.subr.mxu0 0.0
    %146 = vmatpush1.msra.mxu0 0.0
    %147 = vmatprep.subr.mxu0 0.0
    %148 = vmatpush1.msra.mxu0 0.0
    %149 = vmatprep.subr.mxu0 0.0
    %150 = vmatpush1.msra.mxu0 0.0
    %151 = vmatprep.subr.mxu0 0.0
    %152 = vmatpush1.msra.mxu0 0.0
    %153 = vmatprep.subr.mxu0 0.0
    %154 = vmatpush1.msra.mxu0 0.0
    %155 = vmatprep.subr.mxu0 0.0
    %156 = vmatpush1.msra.mxu0 0.0
    %157 = vmatprep.subr.mxu0 0.0
    %158 = vmatpush1.msra.mxu0 0.0
    %159 = vmatprep.subr.mxu0 0.0
    %160 = vmatpush1.msra.mxu0 0.0
    %161 = vmatprep.subr.mxu0 0.0
    %162 = vmatpush1.msra.mxu0 0.0
    %163 = vmatprep.subr.mxu0 0.0
    %164 = vmatpush1.msra.mxu0 0.0
    %165 = vmatprep.subr.mxu0 0.0
    %166 = vmatpush1.msra.mxu0 0.0
    %167 = vmatprep.subr.mxu0 0.0
    %168 = vmatpush1.msra.mxu0 0.0
    %169 = vmatprep.subr.mxu0 0.0
    %170 = vmatpush1.msra.mxu0 0.0
    %171 = vmatprep.mubr.f32.mxu0 0.0
    %172 = vmatmul.mubr.f32.gmra.mrb[0].mxu0 %v105
    %v173 = vpop.f32.mrb[0].mxu0
    %v174 = vadd.f32 0.0, %v173
    %v175 = vpop.f32.mrb[0].mxu0
    %176 = vdwg.mxu0
    %v177 = vlaneseq
    %v178 = vshrl.u32 %v177, 7
    %v179 = vlaneseq
    %v180 = vand.u32 %v179, 127
    %vm181 = vcmp.eq.s32.totalorder %v178, %v180
    %v182 = vsel %vm181, 1, 0
    %v183 = vcvt.s32.f32 %v182
    %v184 = vmul.f32 %v28, %v28
    %v186 = vlaneseq
    %v187 = vshrl.u32 %v186, 7
    %v188 = vsub.s32 0, %v187
    %v189 = vrot.slane %v184, %v188
    %190 = vset.pattern.permute.xlu0 0
    %191 = vperm.xlu0 %190, %v189
    %v192 = vpop.permute.xlu0 %191
    %v194 = vmul.f32 %v192, %v174
    %v196 = vlaneseq
    %v197 = vshrl.u32 %v196, 7
    %v198 = vsub.s32 0, %v197
    %v199 = vrot.slane %v29, %v198
    %200 = vset.pattern.permute.xlu0 1
    %201 = vperm.xlu0 %200, %v199
    %v202 = vpop.permute.xlu0 %201
    %v204 = vmul.f32 %v202, %v183
    %v205 = vadd.f32 %v194, %v204
    %v206 = vld [vmem:[%s1] sm:$0x1]
    %v208 = vlaneseq
    %v209 = vshrl.u32 %v208, 7
    %v210 = vsub.s32 0, %v209
    %v211 = vrot.slane %v206, %v210
    %v213 = vsel %vm181, %v211, 0.0
    %v214 = vsel %vm30, %v213, 0.0
    %215 = vadd.xlane.f32.xlu0 %v214
    %v216 = vpop.xlane.xlu0 %215
    %v217 = vrcp.pop %v205
    %219 = vset.pattern.permute.xlu0 0
    %220 = vperm.xlu0 %219, %v217
    %v221 = vpop.permute.xlu0 %220
    %v223 = vmul.f32 %v205, %v221
    %v224 = vmul.f32 %v216, %v217
    %vm225 = vcmp.eq.s32.totalorder %v178, 0
    %v226 = vsel %vm225, 0.0, %v205
    %228 = vset.pattern.permute.xlu0 0
    %229 = vperm.xlu0 %228, %v226
    %v230 = vpop.permute.xlu0 %229
    %v232 = vlaneseq
    %v233 = vshrl.u32 %v232, 7
    %v234 = vsub.s32 0, %v233
    %v235 = vrot.slane %v223, %v234
    %v236 = vmul.f32 %v230, %v235
    %v237 = vsub.f32 %v205, %v236
    %v238 = vsel %vm225, 1, 0
    %vm239 = vcmp.eq.s32.totalorder %v238, 1
    %v240 = vsel %vm239, %v235, %v237
    %v241 = vlaneseq
    %v242 = vshrl.u32 %v241, 7
    %v243 = vsub.s32 0, %v242
    %v244 = vrot.slane %v224, %v243
    %v245 = vmul.f32 %v226, %v244
    %v246 = vsub.f32 %v216, %v245
    %v247 = vsel %vm225, %v244, %v246
    %v248 = vlaneseq
    %v249 = vshrl.u32 %v248, 7
    %v250 = vsub.s32 0, %v249
    %v251 = vrot.slane %v217, %v250
    %v252 = vmul.f32 %v226, %v251
    %v253 = vsub.f32 1.0, %v252
    %v254 = vsel %vm225, %v251, %v253
    %v255 = vrcp.pop %v240
    %257 = vset.pattern.permute.xlu0 1
    %258 = vperm.xlu0 %257, %v255
    %v259 = vpop.permute.xlu0 %258
    %v261 = vmul.f32 %v240, %v259
    %262 = vrot.lane.b32.xlu0 %v255, 127
    %v263 = vpop.permute.xlu0 %262
    %v265 = vmul.f32 %v247, %v263
    %v266 = vmul.f32 %v254, %v263
    %vm267 = vcmp.eq.s32.totalorder %v178, 1
    %v268 = vsel %vm267, 0.0, %v240
    %270 = vset.pattern.permute.xlu0 1
    %271 = vperm.xlu0 %270, %v268
    %v272 = vpop.permute.xlu0 %271
    %v274 = vlaneseq
    %v275 = vshrl.u32 %v274, 7
    %v276 = vsub.s32 1, %v275
    %v277 = vrot.slane %v261, %v276
    %v278 = vmul.f32 %v272, %v277
    %v279 = vsub.f32 %v240, %v278
    %v280 = vsel %vm267, 1, 0
    %vm281 = vcmp.eq.s32.totalorder %v280, 1
    %v282 = vsel %vm281, %v277, %v279
    %v283 = vlaneseq
    %v284 = vshrl.u32 %v283, 7
    %v285 = vsub.s32 1, %v284
    %v286 = vrot.slane %v265, %v285
    %288 = vrot.lane.b32.xlu0 %v286, 1
    %v289 = vpop.permute.xlu0 %288
    %v291 = vmul.f32 %v268, %v289
    %293 = vrot.lane.b32.xlu0 %v291, 127
    %v294 = vpop.permute.xlu0 %293
    %v296 = vsub.f32 %v247, %v294
    %v297 = vsel %vm267, %v286, %v296
    %v298 = vlaneseq
    %v299 = vshrl.u32 %v298, 7
    %v300 = vsub.s32 1, %v299
    %v301 = vrot.slane %v266, %v300
    %303 = vrot.lane.b32.xlu0 %v301, 1
    %v304 = vpop.permute.xlu0 %303
    %v306 = vmul.f32 %v268, %v304
    %308 = vrot.lane.b32.xlu0 %v306, 127
    %v309 = vpop.permute.xlu0 %308
    %v311 = vsub.f32 %v254, %v309
    %v312 = vsel %vm267, %v301, %v311
    %v313 = vrcp.pop %v282
    %315 = vset.pattern.permute.xlu0 2
    %316 = vperm.xlu0 %315, %v313
    %v317 = vpop.permute.xlu0 %316
    %v319 = vmul.f32 %v282, %v317
    %320 = vrot.lane.b32.xlu0 %v313, 126
    %v321 = vpop.permute.xlu0 %320
    %v323 = vmul.f32 %v297, %v321
    %v324 = vmul.f32 %v312, %v321
    %vm325 = vcmp.eq.s32.totalorder %v178, 2
    %v326 = vsel %vm325, 0.0, %v282
    %328 = vset.pattern.permute.xlu0 2
    %329 = vperm.xlu0 %328, %v326
    %v330 = vpop.permute.xlu0 %329
    %v332 = vlaneseq
    %v333 = vshrl.u32 %v332, 7
    %v334 = vsub.s32 2, %v333
    %v335 = vrot.slane %v319, %v334
    %v336 = vmul.f32 %v330, %v335
    %v337 = vsub.f32 %v282, %v336
    %v338 = vsel %vm325, 1, 0
    %vm339 = vcmp.eq.s32.totalorder %v338, 1
    %v340 = vsel %vm339, %v335, %v337
    %v341 = vlaneseq
    %v342 = vshrl.u32 %v341, 7
    %v343 = vsub.s32 2, %v342
    %v344 = vrot.slane %v323, %v343
    %346 = vrot.lane.b32.xlu0 %v344, 2
    %v347 = vpop.permute.xlu0 %346
    %v349 = vmul.f32 %v326, %v347
    %351 = vrot.lane.b32.xlu0 %v349, 126
    %v352 = vpop.permute.xlu0 %351
    %v354 = vsub.f32 %v297, %v352
    %v355 = vsel %vm325, %v344, %v354
    %v356 = vlaneseq
    %v357 = vshrl.u32 %v356, 7
    %v358 = vsub.s32 2, %v357
    %v359 = vrot.slane %v324, %v358
    %361 = vrot.lane.b32.xlu0 %v359, 2
    %v362 = vpop.permute.xlu0 %361
    %v364 = vmul.f32 %v326, %v362
    %366 = vrot.lane.b32.xlu0 %v364, 126
    %v367 = vpop.permute.xlu0 %366
    %v369 = vsub.f32 %v312, %v367
    %v370 = vsel %vm325, %v359, %v369
    %v371 = vrcp.pop %v340
    %373 = vset.pattern.permute.xlu0 3
    %374 = vperm.xlu0 %373, %v371
    %v375 = vpop.permute.xlu0 %374
    %v377 = vmul.f32 %v340, %v375
    %378 = vrot.lane.b32.xlu0 %v371, 125
    %v379 = vpop.permute.xlu0 %378
    %v381 = vmul.f32 %v355, %v379
    %v382 = vmul.f32 %v370, %v379
    %vm383 = vcmp.eq.s32.totalorder %v178, 3
    %v384 = vsel %vm383, 0.0, %v340
    %386 = vset.pattern.permute.xlu0 3
    %387 = vperm.xlu0 %386, %v384
    %v388 = vpop.permute.xlu0 %387
    %v390 = vlaneseq
    %v391 = vshrl.u32 %v390, 7
    %v392 = vsub.s32 3, %v391
    %v393 = vrot.slane %v377, %v392
    %v394 = vmul.f32 %v388, %v393
    %v395 = vsub.f32 %v340, %v394
    %v396 = vsel %vm383, 1, 0
    %vm397 = vcmp.eq.s32.totalorder %v396, 1
    %v398 = vsel %vm397, %v393, %v395
    %v399 = vlaneseq
    %v400 = vshrl.u32 %v399, 7
    %v401 = vsub.s32 3, %v400
    %v402 = vrot.slane %v381, %v401
    %404 = vrot.lane.b32.xlu0 %v402, 3
    %v405 = vpop.permute.xlu0 %404
    %v407 = vmul.f32 %v384, %v405
    %409 = vrot.lane.b32.xlu0 %v407, 125
    %v410 = vpop.permute.xlu0 %409
    %v412 = vsub.f32 %v355, %v410
    %v413 = vsel %vm383, %v402, %v412
    %v414 = vlaneseq
    %v415 = vshrl.u32 %v414, 7
    %v416 = vsub.s32 3, %v415
    %v417 = vrot.slane %v382, %v416
    %419 = vrot.lane.b32.xlu0 %v417, 3
    %v420 = vpop.permute.xlu0 %419
    %v422 = vmul.f32 %v384, %v420
    %424 = vrot.lane.b32.xlu0 %v422, 125
    %v425 = vpop.permute.xlu0 %424
    %v427 = vsub.f32 %v370, %v425
    %v428 = vsel %vm383, %v417, %v427
    %v429 = vrcp.pop %v398
    %431 = vset.pattern.permute.xlu0 4
    %432 = vperm.xlu0 %431, %v429
    %v433 = vpop.permute.xlu0 %432
    %v435 = vmul.f32 %v398, %v433
    %436 = vrot.lane.b32.xlu0 %v429, 124
    %v437 = vpop.permute.xlu0 %436
    %v439 = vmul.f32 %v413, %v437
    %v440 = vmul.f32 %v428, %v437
    %vm441 = vcmp.eq.s32.totalorder %v178, 4
    %v442 = vsel %vm441, 0.0, %v398
    %444 = vset.pattern.permute.xlu0 4
    %445 = vperm.xlu0 %444, %v442
    %v446 = vpop.permute.xlu0 %445
    %v448 = vlaneseq
    %v449 = vshrl.u32 %v448, 7
    %v450 = vsub.s32 4, %v449
    %v451 = vrot.slane %v435, %v450
    %v452 = vmul.f32 %v446, %v451
    %v453 = vsub.f32 %v398, %v452
    %v454 = vsel %vm441, 1, 0
    %vm455 = vcmp.eq.s32.totalorder %v454, 1
    %v456 = vsel %vm455, %v451, %v453
    %v457 = vlaneseq
    %v458 = vshrl.u32 %v457, 7
    %v459 = vsub.s32 4, %v458
    %v460 = vrot.slane %v439, %v459
    %462 = vrot.lane.b32.xlu0 %v460, 4
    %v463 = vpop.permute.xlu0 %462
    %v465 = vmul.f32 %v442, %v463
    %467 = vrot.lane.b32.xlu0 %v465, 124
    %v468 = vpop.permute.xlu0 %467
    %v470 = vsub.f32 %v413, %v468
    %v471 = vsel %vm441, %v460, %v470
    %v472 = vlaneseq
    %v473 = vshrl.u32 %v472, 7
    %v474 = vsub.s32 4, %v473
    %v475 = vrot.slane %v440, %v474
    %477 = vrot.lane.b32.xlu0 %v475, 4
    %v478 = vpop.permute.xlu0 %477
    %v480 = vmul.f32 %v442, %v478
    %482 = vrot.lane.b32.xlu0 %v480, 124
    %v483 = vpop.permute.xlu0 %482
    %v485 = vsub.f32 %v428, %v483
    %v486 = vsel %vm441, %v475, %v485
    %v487 = vrcp.pop %v456
    %489 = vset.pattern.permute.xlu0 5
    %490 = vperm.xlu0 %489, %v487
    %v491 = vpop.permute.xlu0 %490
    %v493 = vmul.f32 %v456, %v491
    %494 = vrot.lane.b32.xlu0 %v487, 123
    %v495 = vpop.permute.xlu0 %494
    %v497 = vmul.f32 %v471, %v495
    %v498 = vmul.f32 %v486, %v495
    %vm499 = vcmp.eq.s32.totalorder %v178, 5
    %v500 = vsel %vm499, 0.0, %v456
    %502 = vset.pattern.permute.xlu0 5
    %503 = vperm.xlu0 %502, %v500
    %v504 = vpop.permute.xlu0 %503
    %v506 = vlaneseq
    %v507 = vshrl.u32 %v506, 7
    %v508 = vsub.s32 5, %v507
    %v509 = vrot.slane %v493, %v508
    %v510 = vmul.f32 %v504, %v509
    %v511 = vsub.f32 %v456, %v510
    %v512 = vsel %vm499, 1, 0
    %vm513 = vcmp.eq.s32.totalorder %v512, 1
    %v514 = vsel %vm513, %v509, %v511
    %v515 = vlaneseq
    %v516 = vshrl.u32 %v515, 7
    %v517 = vsub.s32 5, %v516
    %v518 = vrot.slane %v497, %v517
    %520 = vrot.lane.b32.xlu0 %v518, 5
    %v521 = vpop.permute.xlu0 %520
    %v523 = vmul.f32 %v500, %v521
    %525 = vrot.lane.b32.xlu0 %v523, 123
    %v526 = vpop.permute.xlu0 %525
    %v528 = vsub.f32 %v471, %v526
    %v529 = vsel %vm499, %v518, %v528
    %v530 = vlaneseq
    %v531 = vshrl.u32 %v530, 7
    %v532 = vsub.s32 5, %v531
    %v533 = vrot.slane %v498, %v532
    %535 = vrot.lane.b32.xlu0 %v533, 5
    %v536 = vpop.permute.xlu0 %535
    %v538 = vmul.f32 %v500, %v536
    %540 = vrot.lane.b32.xlu0 %v538, 123
    %v541 = vpop.permute.xlu0 %540
    %v543 = vsub.f32 %v486, %v541
    %v544 = vsel %vm499, %v533, %v543
    %v545 = vrcp.pop %v514
    %547 = vset.pattern.permute.xlu0 6
    %548 = vperm.xlu0 %547, %v545
    %v549 = vpop.permute.xlu0 %548
    %v551 = vmul.f32 %v514, %v549
    %552 = vrot.lane.b32.xlu0 %v545, 122
    %v553 = vpop.permute.xlu0 %552
    %v555 = vmul.f32 %v529, %v553
    %v556 = vmul.f32 %v544, %v553
    %vm557 = vcmp.eq.s32.totalorder %v178, 6
    %v558 = vsel %vm557, 0.0, %v514
    %560 = vset.pattern.permute.xlu0 6
    %561 = vperm.xlu0 %560, %v558
    %v562 = vpop.permute.xlu0 %561
    %v564 = vlaneseq
    %v565 = vshrl.u32 %v564, 7
    %v566 = vsub.s32 6, %v565
    %v567 = vrot.slane %v551, %v566
    %v568 = vmul.f32 %v562, %v567
    %v569 = vsub.f32 %v514, %v568
    %v570 = vsel %vm557, 1, 0
    %vm571 = vcmp.eq.s32.totalorder %v570, 1
    %v572 = vsel %vm571, %v567, %v569
    %v573 = vlaneseq
    %v574 = vshrl.u32 %v573, 7
    %v575 = vsub.s32 6, %v574
    %v576 = vrot.slane %v555, %v575
    %578 = vrot.lane.b32.xlu0 %v576, 6
    %v579 = vpop.permute.xlu0 %578
    %v581 = vmul.f32 %v558, %v579
    %583 = vrot.lane.b32.xlu0 %v581, 122
    %v584 = vpop.permute.xlu0 %583
    %v586 = vsub.f32 %v529, %v584
    %v587 = vsel %vm557, %v576, %v586
    %v588 = vlaneseq
    %v589 = vshrl.u32 %v588, 7
    %v590 = vsub.s32 6, %v589
    %v591 = vrot.slane %v556, %v590
    %593 = vrot.lane.b32.xlu0 %v591, 6
    %v594 = vpop.permute.xlu0 %593
    %v596 = vmul.f32 %v558, %v594
    %598 = vrot.lane.b32.xlu0 %v596, 122
    %v599 = vpop.permute.xlu0 %598
    %v601 = vsub.f32 %v544, %v599
    %v602 = vsel %vm557, %v591, %v601
    %v603 = vrcp.pop %v572
    %605 = vrot.lane.b32.xlu0 %v603, 121
    %v606 = vpop.permute.xlu0 %605
    %v608 = vmul.f32 %v587, %v606
    %v609 = vmul.f32 %v602, %v606
    %vm610 = vcmp.eq.s32.totalorder %v178, 7
    %v611 = vsel %vm610, 0.0, %v572
    %v612 = vlaneseq
    %v613 = vshrl.u32 %v612, 7
    %v614 = vsub.s32 7, %v613
    %v615 = vrot.slane %v608, %v614
    %617 = vrot.lane.b32.xlu0 %v615, 7
    %v618 = vpop.permute.xlu0 %617
    %v620 = vmul.f32 %v611, %v618
    %622 = vrot.lane.b32.xlu0 %v620, 121
    %v623 = vpop.permute.xlu0 %622
    %v625 = vsub.f32 %v587, %v623
    %v626 = vsel %vm610, %v615, %v625
    %v627 = vlaneseq
    %v628 = vshrl.u32 %v627, 7
    %v629 = vsub.s32 7, %v628
    %v630 = vrot.slane %v609, %v629
    %632 = vrot.lane.b32.xlu0 %v630, 7
    %v633 = vpop.permute.xlu0 %632
    %v635 = vmul.f32 %v611, %v633
    %637 = vrot.lane.b32.xlu0 %v635, 121
    %v638 = vpop.permute.xlu0 %637
    %v640 = vsub.f32 %v602, %v638
    %v641 = vsel %vm610, %v630, %v640
    %vm642 = vcmask 7168
    %v643 = vsel %vm642, %v626, 0.0
    %v644 = vrot.slane %v643, 4
    %v645 = vadd.f32 %v643, %v644
    %v646 = vrot.slane %v645, 2
    %v647 = vadd.f32 %v645, %v646
    %v648 = vrot.slane %v647, 1
    %v649 = vadd.f32 %v647, %v648
    %v650 = vsel %vm642, %v641, 0.0
    %v651 = vrot.slane %v650, 4
    %v652 = vadd.f32 %v650, %v651
    %v653 = vrot.slane %v652, 2
    %v654 = vadd.f32 %v652, %v653
    %v655 = vrot.slane %v654, 1
    %v656 = vadd.f32 %v654, %v655
    %v657 = vsub.f32 %v649, 2.0
    %v658 = vrcp.pop %v656
    %v659 = vmul.f32 %v657, %v658
    %v660 = vmul.f32 %v659, %v641
    %v661 = vsub.f32 %v626, %v660
    %v662 = vmul.f32 %v661, 0.5
    %v663 = vrcp.pop %v28
    %v665 = vlaneseq
    %v666 = vshrl.u32 %v665, 7
    %v667 = vsub.s32 0, %v666
    %v668 = vrot.slane %v663, %v667
    %669 = vrot.lane.b32.xlu0 %v668, 126
    %v670 = vpop.permute.xlu0 %669
    %v672 = vmul.f32 %v662, %v670
    %v673 = vsel %vm642, %v672, -inf
    %v674 = vrot.slane %v673, 4
    %v675 = vmax.f32 %v673, %v674
    %v676 = vrot.slane %v675, 2
    %v677 = vmax.f32 %v675, %v676
    %v678 = vrot.slane %v677, 1
    %v679 = vmax.f32 %v677, %v678
    %v680 = vsub.f32 %v672, %v679
    %v681 = vmul.f32 %v680, 1.442695
    %v682 = vpow.pop %v681
    %v683 = vsel %vm642, %v682, 0.0
    %v684 = vrot.slane %v683, 4
    %v685 = vadd.f32 %v683, %v684
    %v686 = vrot.slane %v685, 2
    %v687 = vadd.f32 %v685, %v686
    %v688 = vrot.slane %v687, 1
    %v689 = vadd.f32 %v687, %v688
    %v690 = vrcp.pop %v689
    %v691 = vmul.f32 %v682, %v690
    %vm692 = vcmp.lt.s32.totalorder %v180, 0
    %v693 = vsub.s32 0, %v180
    %v694 = vsel %vm692, %v693, %v180
    %v695 = vshrl.u32 %v694, 3
    %v696 = vand.u32 %v694, 7
    %v697 = vsub.s32 0, %v696
    %v698 = vsel %vm692, %v697, %v696
    %vm699 = vcmp.ne.s32.totalorder %v698, 0
    %vm700 = vcmp.lt.s32.totalorder %v698, 0
    %vm701 = vmand %vm700, %vm699
    %v702 = vadd.s32 %v698, 8
    %v703 = vsel %vm701, %v702, %v698
    %vm704 = vcmp.eq.s32.totalorder %v703, %v178
    %v705 = vsel %vm704, 1, 0
    %v706 = vcvt.s32.f32 %v705
    %708 = vset.pattern.permute.xlu0 0
    %709 = vperm.xlu0 %708, %v691
    %v710 = vpop.permute.xlu0 %709
    %v712 = vmul.f32 %v706, %v710
    %v713 = vrot.slane %v712, 4
    %v714 = vadd.f32 %v712, %v713
    %v715 = vrot.slane %v714, 2
    %v716 = vadd.f32 %v714, %v715
    %v717 = vrot.slane %v716, 1
    %v718 = vadd.f32 %v716, %v717
    %719 = vst [vmem:[#allocation5] sm:$0x1] %v718
    // Predicated region
    $region18: #{tpu_custom_call.1} parent=1 // pred_check
      _
    $region19: #{tpu_custom_call.1} parent=1 // pred_check_branch
      %721 = sbr.rel (0) target = $region21
    $region20: #{tpu_custom_call.1} parent=1 // pred_region
      %s723 = ssub.s32 16, 16
      %724 = vsyncadd [#allocation4], %s723
      %s726 = sshll.u32 [#allocation5], 4
      %s727 = int_to_ptr.vmem [resolvable:$true] %s726
      %729 = dma.vmem_to_hbm [thread:$0]  %s727, 16, %s3, [#allocation4]
    $region21: #{tpu_custom_call.1} parent=1 // pred_fallthru
      _
    // Predicated region
    $region22: #{tpu_custom_call.1} parent=1 // pred_check
      _
    $region23: #{tpu_custom_call.1} parent=1 // pred_check_branch
      %731 = sbr.rel (0) target = $region25
    $region24: #{tpu_custom_call.1} parent=1 // pred_region
      %732 = dma.done [#allocation4], 16
    $region25: #{tpu_custom_call.1} parent=1 // pred_fallthru
      _
    %733 = vsyncpa [#allocation3], 1
    %734 = vsyncpa [#allocation4], 1

</llo_original>
